<compile_context>
chip_gen: v5e
topology: v5e:2x2
jax: 0.10.0
libtpu: 0.0.40
codegen_flags: <defaults>
</compile_context>

<pallas_src>
import functools

import jax
import jax.numpy as jnp
import numpy as np
from jax.experimental import pallas as pl
from jax.experimental.pallas import tpu as pltpu


def _cls_head_kernel(x_ref, w1_ref, b1_ref, w2_ref, b2_ref, w3_ref, b3_ref, o_ref,
                     *, matmul_dtype):
    # ---- block 1: Linear -> L2 normalize over features -> (dropout = id) -> ReLU ----
    h = jnp.dot(x_ref[...].astype(matmul_dtype), w1_ref[...].astype(matmul_dtype),
                preferred_element_type=jnp.float32) + b1_ref[...]           # (Bt, W/2)
    ss = jnp.sum(h * h, axis=-1, keepdims=True)
    h = jnp.maximum(h * jax.lax.rsqrt(jnp.maximum(ss, 1e-24)), 0.0)

    # ---- block 2: Linear -> L2 normalize over features -> (dropout = id) -> ReLU ----
    h = jnp.dot(h.astype(matmul_dtype), w2_ref[...].astype(matmul_dtype),
                preferred_element_type=jnp.float32) + b2_ref[...]           # (Bt, W/4)
    ss = jnp.sum(h * h, axis=-1, keepdims=True)
    h = jnp.maximum(h * jax.lax.rsqrt(jnp.maximum(ss, 1e-24)), 0.0)

    # ---- block 3: Linear (act='none', norm=False), N=1 -> VPU mul + lane reduce ----
    # TODO(synk): Dropout(p=0.3) is identity here (eval-mode forward); training-mode
    # stochastic dropout (PyTorch RNG) is not reproduced.
    o = jnp.sum(h * w3_ref[...], axis=-1, keepdims=True) + b3_ref[0, 0]     # (Bt, 1)
    o_ref[...] = o.astype(o_ref.dtype)


def cls_head_forward(x, params, *, block_b=512, matmul_dtype=jnp.float32):
    """x: (B, width) float32.  Returns (B, 1) float32."""
    B, W = x.shape
    w1t, b1 = params["w1t"], params["b1"]      # (W, W/2),   (1, W/2)
    w2t, b2 = params["w2t"], params["b2"]      # (W/2, W/4), (1, W/4)
    w3r, b3 = params["w3r"], params["b3"]      # (1, W/4),   (1, 1)
    H1, H2 = w1t.shape[1], w2t.shape[1]

    # Batch tile: multiple of 8 (sublane), big (default 512) to amortize per-step
    # overhead, but capped near ceil(B/2) so small batches still get >=2 grid steps
    # (keeps both v7x TensorCores busy). No padding of x: ragged edge block is fine.
    half = -(-B // 2)
    target = max(8, ((half + 7) // 8) * 8)
    bt = min(block_b, target)
    grid = (pl.cdiv(B, bt),)

    kernel = functools.partial(_cls_head_kernel, matmul_dtype=matmul_dtype)
    out = pl.pallas_call(
        kernel,
        out_shape=jax.ShapeDtypeStruct((B, 1), jnp.float32),
        grid=grid,
        in_specs=[
            pl.BlockSpec((bt, W), lambda i: (i, 0)),     # x: streamed over batch
            pl.BlockSpec((W, H1), lambda i: (0, 0)),     # weights/biases: resident
            pl.BlockSpec((1, H1), lambda i: (0, 0)),
            pl.BlockSpec((H1, H2), lambda i: (0, 0)),
            pl.BlockSpec((1, H2), lambda i: (0, 0)),
            pl.BlockSpec((1, H2), lambda i: (0, 0)),     # w3 as a lane-dense row
            pl.BlockSpec(memory_space=pltpu.MemorySpace.SMEM),   # b3 scalar
        ],
        out_specs=pl.BlockSpec((bt, 1), lambda i: (i, 0)),
        compiler_params=pltpu.CompilerParams(
            dimension_semantics=("parallel",)),
    )(x, w1t, b1, w2t, b2, w3r, b3)
    return out


def init_params(key, width):
    """Deterministic synthetic parameters (PyTorch nn.Linear-shaped, then repacked)."""
    h1, h2 = width // 2, width // 4
    ks = jax.random.split(key, 6)

    def lin(kw, kb, c_in, c_out):
        s = 1.0 / np.sqrt(c_in)
        w = jax.random.uniform(kw, (c_out, c_in), jnp.float32, -s, s)
        b = jax.random.uniform(kb, (c_out,), jnp.float32, -s, s)
        return w, b

    w1, b1 = lin(ks[0], ks[1], width, h1)
    w2, b2 = lin(ks[2], ks[3], h1, h2)
    w3, b3 = lin(ks[4], ks[5], h2, 1)

    params = dict(
        w1t=w1.T, b1=b1[None, :],
        w2t=w2.T, b2=b2[None, :],
        w3r=w3,   b3=b3[None, :],        # w3 is already (1, h2): use it as a row
    )
    ref = dict(w1=w1, b1=b1, w2=w2, b2=b2, w3=w3, b3=b3)
    return params, ref


def cls_head_reference(x, ref):
    """Pure-JAX replica of the PyTorch forward (eval mode)."""
    hp = jax.lax.Precision.HIGHEST

    def normalize(h):
        n = jnp.sqrt(jnp.sum(h * h, axis=1, keepdims=True))
        return h / jnp.maximum(n, 1e-12)

    h = jnp.dot(x, ref["w1"].T, precision=hp) + ref["b1"]
    h = jnp.maximum(normalize(h), 0.0)
    h = jnp.dot(h, ref["w2"].T, precision=hp) + ref["b2"]
    h = jnp.maximum(normalize(h), 0.0)
    return jnp.dot(h, ref["w3"].T, precision=hp) + ref["b3"]


if __name__ == "__main__":
    key = jax.random.PRNGKey(0)
    kx, kp, kx2 = jax.random.split(key, 3)

    # CLS_Head(width=256): 256 -> 128 -> 64 -> 1
    B, width = 8, 256
    x = jax.random.normal(kx, (B, width), jnp.float32)
    params, ref = init_params(kp, width)

    out = jax.block_until_ready(cls_head_forward(x, params))
    assert out.shape == (B, 1)
    np.testing.assert_allclose(np.asarray(out),
                               np.asarray(cls_head_reference(x, ref)),
                               atol=2e-4, rtol=2e-3)

    # Ragged batch + multi-step grid (exercises edge-block masking, no pad copy).
    B2 = 200
    x2 = jax.random.normal(kx2, (B2, width), jnp.float32)
    out2 = jax.block_until_ready(cls_head_forward(x2, params))
    assert out2.shape == (B2, 1)
    np.testing.assert_allclose(np.asarray(out2),
                               np.asarray(cls_head_reference(x2, ref)),
                               atol=2e-4, rtol=2e-3)

    # bf16 MXU operands (v5e MXU rate / HBM bandwidth), f32 accumulation.
    out3 = jax.block_until_ready(
        cls_head_forward(x2, params, matmul_dtype=jnp.bfloat16))
    np.testing.assert_allclose(np.asarray(out3),
                               np.asarray(cls_head_reference(x2, ref)),
                               atol=3e-2, rtol=3e-2)

    print("KERNEL_OK")
</pallas_src>

<mosaic_0001>
module attributes {stable_mosaic.version = 11 : i64} {
  func.func @_cls_head_kernel(%arg0: i32, %arg1: memref<8x256xf32, #tpu.memory_space<vmem>>, %arg2: memref<256x128xf32, #tpu.memory_space<vmem>>, %arg3: memref<1x128xf32, #tpu.memory_space<vmem>>, %arg4: memref<128x64xf32, #tpu.memory_space<vmem>>, %arg5: memref<1x64xf32, #tpu.memory_space<vmem>>, %arg6: memref<1x64xf32, #tpu.memory_space<vmem>>, %arg7: memref<1x1xf32, #tpu.memory_space<smem>>, %arg8: memref<8x1xf32, #tpu.memory_space<vmem>>) attributes {dimension_semantics = [#tpu.dimension_semantics<parallel>], iteration_bounds = array<i64: 1>, scalar_prefetch = 0 : i64, scratch_operands = 0 : i64, tpu.core_type = #tpu.core_type<tc>, window_params = [{transform_indices = @transform_0, window_bounds = array<i64: 8, 256>}, {pipeline_mode = #tpu.pipeline_mode<synchronous>, transform_indices = @transform_1, window_bounds = array<i64: 256, 128>}, {pipeline_mode = #tpu.pipeline_mode<synchronous>, transform_indices = @transform_2, window_bounds = array<i64: 1, 128>}, {pipeline_mode = #tpu.pipeline_mode<synchronous>, transform_indices = @transform_3, window_bounds = array<i64: 128, 64>}, {pipeline_mode = #tpu.pipeline_mode<synchronous>, transform_indices = @transform_4, window_bounds = array<i64: 1, 64>}, {pipeline_mode = #tpu.pipeline_mode<synchronous>, transform_indices = @transform_5, window_bounds = array<i64: 1, 64>}, {transform_indices = @transform_6, window_bounds = array<i64: 1, 1>}, {transform_indices = @transform_7, window_bounds = array<i64: 8, 1>}]} {
    %c0 = arith.constant 0 : index
    %c0_0 = arith.constant 0 : index
    %0 = vector.load %arg1[%c0, %c0_0] : memref<8x256xf32, #tpu.memory_space<vmem>>, vector<8x256xf32>
    %c0_1 = arith.constant 0 : index
    %c0_2 = arith.constant 0 : index
    %1 = vector.load %arg2[%c0_1, %c0_2] : memref<256x128xf32, #tpu.memory_space<vmem>>, vector<256x128xf32>
    %cst = arith.constant dense<0.000000e+00> : vector<8x128xf32>
    %2 = tpu.matmul %0, %1, %cst {dimension_numbers = #tpu.dot_dimension_numbers<[1], [0], [0], [1], [0, 0, 1, 1], [], []>} : vector<8x256xf32>, vector<256x128xf32>, vector<8x128xf32> -> vector<8x128xf32>
    %c0_3 = arith.constant 0 : index
    %c0_4 = arith.constant 0 : index
    %3 = vector.load %arg3[%c0_3, %c0_4] : memref<1x128xf32, #tpu.memory_space<vmem>>, vector<1x128xf32>
    %4 = vector.broadcast %3 : vector<1x128xf32> to vector<8x128xf32>
    %5 = arith.addf %2, %4 : vector<8x128xf32>
    %6 = arith.mulf %5, %5 : vector<8x128xf32>
    %cst_5 = arith.constant dense<0.000000e+00> : vector<8xf32>
    %7 = vector.multi_reduction <add>, %6, %cst_5 [1] : vector<8x128xf32> to vector<8xf32>
    %8 = vector.shape_cast %7 : vector<8xf32> to vector<8x1xf32>
    %cst_6 = arith.constant 1.000000e-24 : f32
    %9 = vector.broadcast %cst_6 : f32 to vector<8x1xf32>
    %10 = arith.maximumf %8, %9 : vector<8x1xf32>
    %11 = math.rsqrt %10 : vector<8x1xf32>
    %12 = vector.broadcast %11 : vector<8x1xf32> to vector<8x128xf32>
    %13 = arith.mulf %5, %12 : vector<8x128xf32>
    %cst_7 = arith.constant 0.000000e+00 : f32
    %14 = vector.broadcast %cst_7 : f32 to vector<8x128xf32>
    %15 = arith.maximumf %13, %14 : vector<8x128xf32>
    %c0_8 = arith.constant 0 : index
    %c0_9 = arith.constant 0 : index
    %16 = vector.load %arg4[%c0_8, %c0_9] : memref<128x64xf32, #tpu.memory_space<vmem>>, vector<128x64xf32>
    %cst_10 = arith.constant dense<0.000000e+00> : vector<8x64xf32>
    %17 = tpu.matmul %15, %16, %cst_10 {dimension_numbers = #tpu.dot_dimension_numbers<[1], [0], [0], [1], [0, 0, 1, 1], [], []>} : vector<8x128xf32>, vector<128x64xf32>, vector<8x64xf32> -> vector<8x64xf32>
    %c0_11 = arith.constant 0 : index
    %c0_12 = arith.constant 0 : index
    %18 = vector.load %arg5[%c0_11, %c0_12] : memref<1x64xf32, #tpu.memory_space<vmem>>, vector<1x64xf32>
    %19 = vector.broadcast %18 : vector<1x64xf32> to vector<8x64xf32>
    %20 = arith.addf %17, %19 : vector<8x64xf32>
    %21 = arith.mulf %20, %20 : vector<8x64xf32>
    %cst_13 = arith.constant dense<0.000000e+00> : vector<8xf32>
    %22 = vector.multi_reduction <add>, %21, %cst_13 [1] : vector<8x64xf32> to vector<8xf32>
    %23 = vector.shape_cast %22 : vector<8xf32> to vector<8x1xf32>
    %cst_14 = arith.constant 1.000000e-24 : f32
    %24 = vector.broadcast %cst_14 : f32 to vector<8x1xf32>
    %25 = arith.maximumf %23, %24 : vector<8x1xf32>
    %26 = math.rsqrt %25 : vector<8x1xf32>
    %27 = vector.broadcast %26 : vector<8x1xf32> to vector<8x64xf32>
    %28 = arith.mulf %20, %27 : vector<8x64xf32>
    %cst_15 = arith.constant 0.000000e+00 : f32
    %29 = vector.broadcast %cst_15 : f32 to vector<8x64xf32>
    %30 = arith.maximumf %28, %29 : vector<8x64xf32>
    %c0_16 = arith.constant 0 : index
    %c0_17 = arith.constant 0 : index
    %31 = vector.load %arg6[%c0_16, %c0_17] : memref<1x64xf32, #tpu.memory_space<vmem>>, vector<1x64xf32>
    %32 = vector.broadcast %31 : vector<1x64xf32> to vector<8x64xf32>
    %33 = arith.mulf %30, %32 : vector<8x64xf32>
    %cst_18 = arith.constant dense<0.000000e+00> : vector<8xf32>
    %34 = vector.multi_reduction <add>, %33, %cst_18 [1] : vector<8x64xf32> to vector<8xf32>
    %35 = vector.shape_cast %34 : vector<8xf32> to vector<8x1xf32>
    %c0_19 = arith.constant 0 : index
    %c0_20 = arith.constant 0 : index
    %36 = memref.load %arg7[%c0_19, %c0_20] : memref<1x1xf32, #tpu.memory_space<smem>>
    %37 = vector.broadcast %36 : f32 to vector<8x1xf32>
    %38 = arith.addf %35, %37 : vector<8x1xf32>
    %c0_21 = arith.constant 0 : index
    %c0_22 = arith.constant 0 : index
    %39 = vector.load %arg8[%c0_21, %c0_22] : memref<8x1xf32, #tpu.memory_space<vmem>>, vector<8x1xf32>
    tpu.vector_store %arg8[%c0_21, %c0_22], %38 {strides = array<i32>} : memref<8x1xf32, #tpu.memory_space<vmem>>, vector<8x1xf32>,
    return
  }
  func.func @transform_0(%arg0: i32) -> (i32, i32) {
    %c0_i32 = arith.constant 0 : i32
    %c0_i32_0 = arith.constant 0 : i32
    return %arg0, %c0_i32 : i32, i32
  }
  func.func @transform_1(%arg0: i32) -> (i32, i32) {
    %c0_i32 = arith.constant 0 : i32
    %c0_i32_0 = arith.constant 0 : i32
    %c0_i32_1 = arith.constant 0 : i32
    return %c0_i32, %c0_i32_0 : i32, i32
  }
  func.func @transform_2(%arg0: i32) -> (i32, i32) {
    %c0_i32 = arith.constant 0 : i32
    %c0_i32_0 = arith.constant 0 : i32
    %c0_i32_1 = arith.constant 0 : i32
    return %c0_i32, %c0_i32_0 : i32, i32
  }
  func.func @transform_3(%arg0: i32) -> (i32, i32) {
    %c0_i32 = arith.constant 0 : i32
    %c0_i32_0 = arith.constant 0 : i32
    %c0_i32_1 = arith.constant 0 : i32
    return %c0_i32, %c0_i32_0 : i32, i32
  }
  func.func @transform_4(%arg0: i32) -> (i32, i32) {
    %c0_i32 = arith.constant 0 : i32
    %c0_i32_0 = arith.constant 0 : i32
    %c0_i32_1 = arith.constant 0 : i32
    return %c0_i32, %c0_i32_0 : i32, i32
  }
  func.func @transform_5(%arg0: i32) -> (i32, i32) {
    %c0_i32 = arith.constant 0 : i32
    %c0_i32_0 = arith.constant 0 : i32
    %c0_i32_1 = arith.constant 0 : i32
    return %c0_i32, %c0_i32_0 : i32, i32
  }
  func.func @transform_6(%arg0: i32) -> (i32, i32) {
    %c0_i32 = arith.constant 0 : i32
    %c0_i32_0 = arith.constant 0 : i32
    %c0_i32_1 = arith.constant 0 : i32
    return %c0_i32, %c0_i32_0 : i32, i32
  }
  func.func @transform_7(%arg0: i32) -> (i32, i32) {
    %c0_i32 = arith.constant 0 : i32
    %c0_i32_0 = arith.constant 0 : i32
    return %arg0, %c0_i32 : i32, i32
  }
}

</mosaic_0001>

<llo_original>
// kernel: tpu_custom_call.1
$region0: #{tpu_custom_call.1}
  #allocation0 [shape = 'u32[]', space=smem, size = 0x4, offset = 0x4, fixed_abs, tag = 'smem constant byte address 0x4 - core index']
  #allocation1 [shape = 'u32[72,128]{1,0:T(1,128)}', space=vmem, size = 0x9000, scoped, tag = 'internal scratch']
  #allocation2 [shape = 'f32[1,1]{1,0:T(1,128)S(6)}', space=smem, size = 0x200, scoped, tag = 'scoped memory for tpu_custom_call.1']
  %s0 = inlined_call_operand.vmem [shape: f32[8,256], index: 0, kind: input, shape index: {}]
  %s1 = inlined_call_operand.hbm [shape: f32[256,128], index: 1, kind: input, shape index: {}]
  %s2 = inlined_call_operand.vmem [shape: f32[1,128], index: 2, kind: input, shape index: {}]
  %s3 = inlined_call_operand.vmem [shape: f32[128,64], index: 3, kind: input, shape index: {}]
  %s4 = inlined_call_operand.vmem [shape: f32[1,64], index: 4, kind: input, shape index: {}]
  %s5 = inlined_call_operand.vmem [shape: f32[1,64], index: 5, kind: input, shape index: {}]
  %s6 = inlined_call_operand.<no memory space> [shape: f32[1,1], index: 6, kind: input, shape index: {}]
  %s7 = inlined_call_operand.vmem [shape: f32[8,1], index: 7, kind: output, shape index: {}]
  %s8 = sld [smem:[#allocation0]]
  $region42: #{tpu_custom_call.1} parent=0
    _
  %s10 = ssub.s32 1, %s8
  %s11 = scalar_select 0, %s10, %s8
  %12 = sst [smem:[#allocation2]] %s6
  $region1: #{tpu_custom_call.1} parent=0
    #allocation3 [shape = 'u8[131072]{0}', space=vmem, size = 0x20000, scoped, tag = 'input window, operand 1, single buffered']
    #allocation4 [shape = 's32[1]{0}', space=sflag, size = 0x4, scoped, tag = 'scoped memory for tpu_custom_call.1']
    %13 = vsyncpa [#allocation4], 0
    // Predicated region
    $region2: #{tpu_custom_call.1} parent=1 // pred_check
      _
    $region3: #{tpu_custom_call.1} parent=1 // pred_check_branch
      %15 = sbr.rel (0) target = $region5
    $region4: #{tpu_custom_call.1} parent=1 // pred_region
      _
    $region5: #{tpu_custom_call.1} parent=1 // pred_fallthru
      _
    // Predicated region
    $region6: #{tpu_custom_call.1} parent=1 // pred_check
      _
    $region7: #{tpu_custom_call.1} parent=1 // pred_check_branch
      %17 = sbr.rel (0) target = $region9
    $region8: #{tpu_custom_call.1} parent=1 // pred_region
      %19 = vsyncadd [#allocation4], 0
      %s20 = sshll.u32 %s1, 4
      %s21 = int_to_ptr.hbm [resolvable:$true] %s20
      %s22 = sshll.u32 [#allocation3], 4
      %s23 = int_to_ptr.vmem [resolvable:$true] %s22
      %28 = dma.hbm_to_vmem [thread:$0]  %s21, 4096, %s23, [#allocation4], 128, 128, 8
    $region9: #{tpu_custom_call.1} parent=1 // pred_fallthru
      _
    // Predicated region
    $region10: #{tpu_custom_call.1} parent=1 // pred_check
      _
    $region11: #{tpu_custom_call.1} parent=1 // pred_check_branch
      %30 = sbr.rel (0) target = $region13
    $region12: #{tpu_custom_call.1} parent=1 // pred_region
      _
    $region13: #{tpu_custom_call.1} parent=1 // pred_fallthru
      _
    // Predicated region
    $region14: #{tpu_custom_call.1} parent=1 // pred_check
      _
    $region15: #{tpu_custom_call.1} parent=1 // pred_check_branch
      %32 = sbr.rel (0) target = $region17
    $region16: #{tpu_custom_call.1} parent=1 // pred_region
      _
    $region17: #{tpu_custom_call.1} parent=1 // pred_fallthru
      _
    // Predicated region
    $region18: #{tpu_custom_call.1} parent=1 // pred_check
      _
    $region19: #{tpu_custom_call.1} parent=1 // pred_check_branch
      %34 = sbr.rel (0) target = $region21
    $region20: #{tpu_custom_call.1} parent=1 // pred_region
      _
    $region21: #{tpu_custom_call.1} parent=1 // pred_fallthru
      _
    // Predicated region
    $region22: #{tpu_custom_call.1} parent=1 // pred_check
      _
    $region23: #{tpu_custom_call.1} parent=1 // pred_check_branch
      %36 = sbr.rel (0) target = $region25
    $region24: #{tpu_custom_call.1} parent=1 // pred_region
      _
    $region25: #{tpu_custom_call.1} parent=1 // pred_fallthru
      _
    // Predicated region
    $region26: #{tpu_custom_call.1} parent=1 // pred_check
      _
    $region27: #{tpu_custom_call.1} parent=1 // pred_check_branch
      %38 = sbr.rel (0) target = $region29
    $region28: #{tpu_custom_call.1} parent=1 // pred_region
      _
    $region29: #{tpu_custom_call.1} parent=1 // pred_fallthru
      _
    // Predicated region
    $region30: #{tpu_custom_call.1} parent=1 // pred_check
      _
    $region31: #{tpu_custom_call.1} parent=1 // pred_check_branch
      %40 = sbr.rel (0) target = $region33
    $region32: #{tpu_custom_call.1} parent=1 // pred_region
      %42 = dma.done [#allocation4], 4096
    $region33: #{tpu_custom_call.1} parent=1 // pred_fallthru
      _
    %v43 = vld [vmem:[%s0] sm:$0xff]
    %v44 = vld [vmem:[%s0 + $0x8] sm:$0xff]
    %v45 = vld [vmem:[#allocation3] sm:$0xff]
    %v46 = vld [vmem:[#allocation3 + $0x8] sm:$0xff]
    %v47 = vld [vmem:[#allocation3 + $0x10] sm:$0xff]
    %v48 = vld [vmem:[#allocation3 + $0x18] sm:$0xff]
    %v49 = vld [vmem:[#allocation3 + $0x20] sm:$0xff]
    %v50 = vld [vmem:[#allocation3 + $0x28] sm:$0xff]
    %v51 = vld [vmem:[#allocation3 + $0x30] sm:$0xff]
    %v52 = vld [vmem:[#allocation3 + $0x38] sm:$0xff]
    %v53 = vld [vmem:[#allocation3 + $0x40] sm:$0xff]
    %v54 = vld [vmem:[#allocation3 + $0x48] sm:$0xff]
    %v55 = vld [vmem:[#allocation3 + $0x50] sm:$0xff]
    %v56 = vld [vmem:[#allocation3 + $0x58] sm:$0xff]
    %v57 = vld [vmem:[#allocation3 + $0x60] sm:$0xff]
    %v58 = vld [vmem:[#allocation3 + $0x68] sm:$0xff]
    %v59 = vld [vmem:[#allocation3 + $0x70] sm:$0xff]
    %v60 = vld [vmem:[#allocation3 + $0x78] sm:$0xff]
    %v61 = vld [vmem:[#allocation3 + $0x80] sm:$0xff]
    %v62 = vld [vmem:[#allocation3 + $0x88] sm:$0xff]
    %v63 = vld [vmem:[#allocation3 + $0x90] sm:$0xff]
    %v64 = vld [vmem:[#allocation3 + $0x98] sm:$0xff]
    %v65 = vld [vmem:[#allocation3 + $0xa0] sm:$0xff]
    %v66 = vld [vmem:[#allocation3 + $0xa8] sm:$0xff]
    %v67 = vld [vmem:[#allocation3 + $0xb0] sm:$0xff]
    %v68 = vld [vmem:[#allocation3 + $0xb8] sm:$0xff]
    %v69 = vld [vmem:[#allocation3 + $0xc0] sm:$0xff]
    %v70 = vld [vmem:[#allocation3 + $0xc8] sm:$0xff]
    %v71 = vld [vmem:[#allocation3 + $0xd0] sm:$0xff]
    %v72 = vld [vmem:[#allocation3 + $0xd8] sm:$0xff]
    %v73 = vld [vmem:[#allocation3 + $0xe0] sm:$0xff]
    %v74 = vld [vmem:[#allocation3 + $0xe8] sm:$0xff]
    %v75 = vld [vmem:[#allocation3 + $0xf0] sm:$0xff]
    %v76 = vld [vmem:[#allocation3 + $0xf8] sm:$0xff]
    %v77 = vld [vmem:[%s2] sm:$0x1]
    %v79 = vperm.slane %v77, 0
    %81 = vmatpush.msra.mxu0 %v60
    %82 = vmatpush.msra.mxu0 %v59
    %83 = vmatpush.msra.mxu0 %v58
    %84 = vmatpush.msra.mxu0 %v57
    %85 = vmatpush.msra.mxu0 %v56
    %86 = vmatpush.msra.mxu0 %v55
    %87 = vmatpush.msra.mxu0 %v54
    %88 = vmatpush.msra.mxu0 %v53
    %89 = vmatpush.msra.mxu0 %v52
    %90 = vmatpush.msra.mxu0 %v51
    %91 = vmatpush.msra.mxu0 %v50
    %92 = vmatpush.msra.mxu0 %v49
    %93 = vmatpush.msra.mxu0 %v48
    %94 = vmatpush.msra.mxu0 %v47
    %95 = vmatpush.msra.mxu0 %v46
    %96 = vmatpush.msra.mxu0 %v45
    %97 = vmatmul.f32.gmra.mxu0 %v43
    %v98 = vpop.f32.mrf.mxu0
    %v99 = vadd.f32 %v79, %v98
    %100 = vdwg.mxu0
    %101 = vmatpush.msra.mxu0 %v76
    %102 = vmatpush.msra.mxu0 %v75
    %103 = vmatpush.msra.mxu0 %v74
    %104 = vmatpush.msra.mxu0 %v73
    %105 = vmatpush.msra.mxu0 %v72
    %106 = vmatpush.msra.mxu0 %v71
    %107 = vmatpush.msra.mxu0 %v70
    %108 = vmatpush.msra.mxu0 %v69
    %109 = vmatpush.msra.mxu0 %v68
    %110 = vmatpush.msra.mxu0 %v67
    %111 = vmatpush.msra.mxu0 %v66
    %112 = vmatpush.msra.mxu0 %v65
    %113 = vmatpush.msra.mxu0 %v64
    %114 = vmatpush.msra.mxu0 %v63
    %115 = vmatpush.msra.mxu0 %v62
    %116 = vmatpush.msra.mxu0 %v61
    %117 = vmatmul.f32.gmra.mxu0 %v44
    %v118 = vpop.f32.mrf.mxu0
    %v119 = vadd.f32 %v99, %v118
    %120 = vdwg.mxu0
    %v121 = vmul.f32 %v119, %v119
    %122 = vadd.xlane.f32.xlu0 %v121
    %v123 = vpop.xlane.xlu0 %122
    %v124 = vmax.f32 %v123, 1e-24
    %v125 = vrsqrt.pop %v124
    %v126 = vmul.f32 %v125, %v124
    %v127 = vmul.f32 %v126, %v125
    %v128 = vmul.f32 0.5, %v127
    %v129 = vsub.f32 1.5, %v128
    %v130 = vmul.f32 %v125, %v129
    %vm131 = vweird.f32 %v124
    %vm132 = vweird.f32 %v125
    %vm133 = vmor %vm131, %vm132
    %v134 = vsel %vm133, %v125, %v130
    %v135 = vmul.f32 %v119, %v134
    %v136 = vmax.f32 %v135, 0.0
    %v137 = vld [vmem:[%s3] sm:$0xff]
    %v138 = vld [vmem:[%s3 + $0x8] sm:$0xff]
    %v139 = vld [vmem:[%s3 + $0x10] sm:$0xff]
    %v140 = vld [vmem:[%s3 + $0x18] sm:$0xff]
    %v141 = vld [vmem:[%s3 + $0x20] sm:$0xff]
    %v142 = vld [vmem:[%s3 + $0x28] sm:$0xff]
    %v143 = vld [vmem:[%s3 + $0x30] sm:$0xff]
    %v144 = vld [vmem:[%s3 + $0x38] sm:$0xff]
    %v145 = vld [vmem:[%s3 + $0x40] sm:$0xff]
    %v146 = vld [vmem:[%s3 + $0x48] sm:$0xff]
    %v147 = vld [vmem:[%s3 + $0x50] sm:$0xff]
    %v148 = vld [vmem:[%s3 + $0x58] sm:$0xff]
    %v149 = vld [vmem:[%s3 + $0x60] sm:$0xff]
    %v150 = vld [vmem:[%s3 + $0x68] sm:$0xff]
    %v151 = vld [vmem:[%s3 + $0x70] sm:$0xff]
    %v152 = vld [vmem:[%s3 + $0x78] sm:$0xff]
    %v153 = vld [vmem:[%s4] sm:$0x1]
    %v155 = vperm.slane %v153, 0
    %157 = vmatpush.msra.mxu0 %v152
    %158 = vmatpush.msra.mxu0 %v151
    %159 = vmatpush.msra.mxu0 %v150
    %160 = vmatpush.msra.mxu0 %v149
    %161 = vmatpush.msra.mxu0 %v148
    %162 = vmatpush.msra.mxu0 %v147
    %163 = vmatpush.msra.mxu0 %v146
    %164 = vmatpush.msra.mxu0 %v145
    %165 = vmatpush.msra.mxu0 %v144
    %166 = vmatpush.msra.mxu0 %v143
    %167 = vmatpush.msra.mxu0 %v142
    %168 = vmatpush.msra.mxu0 %v141
    %169 = vmatpush.msra.mxu0 %v140
    %170 = vmatpush.msra.mxu0 %v139
    %171 = vmatpush.msra.mxu0 %v138
    %172 = vmatpush.msra.mxu0 %v137
    %173 = vmatmul.f32.gmra.mxu0 %v136
    %v174 = vpop.f32.mrf.mxu0
    %v175 = vadd.f32 %v155, %v174
    %176 = vdwg.mxu0
    %v177 = vmul.f32 %v175, %v175
    %vm178 = vcmask 523264
    %v179 = vsel %vm178, %v177, 0.0
    %180 = vadd.xlane.f32.xlu0 %v179
    %v181 = vpop.xlane.xlu0 %180
    %v182 = vmax.f32 %v181, 1e-24
    %v183 = vrsqrt.pop %v182
    %v184 = vmul.f32 %v183, %v182
    %v185 = vmul.f32 %v184, %v183
    %v186 = vmul.f32 0.5, %v185
    %v187 = vsub.f32 1.5, %v186
    %v188 = vmul.f32 %v183, %v187
    %vm189 = vweird.f32 %v182
    %vm190 = vweird.f32 %v183
    %vm191 = vmor %vm189, %vm190
    %v192 = vsel %vm191, %v183, %v188
    %v193 = vmul.f32 %v175, %v192
    %v194 = vmax.f32 %v193, 0.0
    %v195 = vld [vmem:[%s5] sm:$0x1]
    %v197 = vperm.slane %v195, 0
    %v199 = vmul.f32 %v194, %v197
    %v200 = vsel %vm178, %v199, 0.0
    %201 = vadd.xlane.f32.xlu0 %v200
    %v202 = vpop.xlane.xlu0 %201
    %s203 = sld [smem:[#allocation2]]
    %v204 = vstv %s203
    %v205 = vadd.f32 %v202, %v204
    %vm206 = vcmask 7168
    %207 = vst.msk [vmem:[%s7] sm:$0xff] %vm206, %v205
    // Predicated region
    $region34: #{tpu_custom_call.1} parent=1 // pred_check
      _
    $region35: #{tpu_custom_call.1} parent=1 // pred_check_branch
      %209 = sbr.rel (0) target = $region37
    $region36: #{tpu_custom_call.1} parent=1 // pred_region
      _
    $region37: #{tpu_custom_call.1} parent=1 // pred_fallthru
      _
    // Predicated region
    $region38: #{tpu_custom_call.1} parent=1 // pred_check
      _
    $region39: #{tpu_custom_call.1} parent=1 // pred_check_branch
      %211 = sbr.rel (0) target = $region41
    $region40: #{tpu_custom_call.1} parent=1 // pred_region
      _
    $region41: #{tpu_custom_call.1} parent=1 // pred_fallthru
      _
    %212 = vsyncpa [#allocation4], 1

</llo_original>
